<compile_context>
chip_gen: v5e
topology: v5e:2x2
jax: 0.10.0
libtpu: 0.0.40
codegen_flags: <defaults>
</compile_context>

<pallas_src>
import functools

import jax
import jax.numpy as jnp
from jax.experimental import pallas as pl
from jax.experimental.pallas import tpu as pltpu

_LANES = 128
_SUBLANES = 8
_CHUNK_ROWS = 2048                       # in-kernel compute chunk: 1 MiB f32 per value
_TARGET_BLOCK_BYTES = 4 * 1024 * 1024    # per-input HBM block per grid step
_VMEM_LIMIT_BYTES = 32 * 1024 * 1024     # 2 inputs x 2 buffers x 4 MiB + temporaries

# dtypes streamed natively and cast to f32 on-chip; anything else is cast in
# the wrapper (rare).
_NATIVE_DTYPES = (jnp.float32, jnp.bfloat16, jnp.int8, jnp.int32)


def _surface_loss_kernel(o_ref, b_ref, out_ref, acc_ref, *,
                         tile_rows, blocks_per_core, rows_valid, any_ragged):
    i = pl.program_id(1)

    @pl.when(i == 0)
    def _init():
        acc_ref[...] = jnp.zeros_like(acc_ref)

    logical_block = pl.program_id(0) * blocks_per_core + i
    block_row0 = logical_block * tile_rows

    def _accumulate(prod):
        r = prod.shape[0]
        if r % _SUBLANES == 0:
            # Layout-free reshape; sum over the leading axis is vreg-wise VALU
            # adds into a single (8, 128) accumulator vreg.
            acc_ref[...] += prod.reshape(-1, _SUBLANES, _LANES).sum(axis=0)
        else:
            # Rare: full-extent block whose row count isn't a multiple of 8.
            acc_ref[0:1, :] = acc_ref[0:1, :] + prod.sum(axis=0, keepdims=True)

    def _process(c0, c1, masked):
        prod = (o_ref[c0:c1, :].astype(jnp.float32) *
                b_ref[c0:c1, :].astype(jnp.float32))
        if masked:
            # Rows past `rows_valid` hold unspecified data (ragged last block
            # or clamped duplicate block); jnp.where *selects*, so garbage
            # (even NaN/Inf) is discarded.  Do not turn this into a
            # multiplicative mask.
            row_ids = (block_row0 + c0 +
                       jax.lax.broadcasted_iota(jnp.int32, prod.shape, 0))
            prod = jnp.where(row_ids < rows_valid, prod, jnp.float32(0.0))
        _accumulate(prod)

    for c0 in range(0, tile_rows, _CHUNK_ROWS):
        c1 = min(c0 + _CHUNK_ROWS, tile_rows)
        if any_ragged:
            # Fast path for chunks that are fully in range at run time; only
            # the ragged / duplicate chunks pay the iota + compare + select.
            @pl.when(block_row0 + c1 <= rows_valid)
            def _full(c0=c0, c1=c1):
                _process(c0, c1, masked=False)

            @pl.when(block_row0 + c1 > rows_valid)
            def _partial(c0=c0, c1=c1):
                _process(c0, c1, masked=True)
        else:
            _process(c0, c1, masked=False)

    @pl.when(i == pl.num_programs(1) - 1)
    def _finalize():
        out_ref[0, 0] = jnp.sum(acc_ref[...])


def _num_tensorcores():
    """2 on chips with two TensorCores sharing HBM (v7x); 1 on v5e / v6e."""
    try:
        kind = jax.devices()[0].device_kind.lower()
    except Exception:
        return 1
    return 2 if "v7" in kind else 1


def surface_loss(output, bounds, target=None):
    """Pallas equivalent of SurfaceLoss.forward: mean(output * bounds)."""
    del target  # unused by the reference forward pass (only cast to float)

    def _prep(x):
        x = jnp.asarray(x)
        if any(x.dtype == jnp.dtype(d) for d in _NATIVE_DTYPES):
            return x                       # stream native dtype; cast on the VPU
        return x.astype(jnp.float32)       # f64/bool/etc. (f64 -> f32 semantics)

    o = _prep(output).reshape(-1)
    b = _prep(bounds).reshape(-1)
    assert o.shape == b.shape, "output and bounds must have the same #elements"
    n = o.shape[0]

    # 128-aligned prefix goes through the kernel; the <128-element tail (if
    # any) is summed here instead of padding (a pad would copy both arrays).
    n_main = (n // _LANES) * _LANES
    tail = jnp.float32(0.0)
    if n_main != n:
        tail = jnp.sum(o[n_main:].astype(jnp.float32) *
                       b[n_main:].astype(jnp.float32))
    if n_main == 0:
        return tail / jnp.float32(n)

    rows = n_main // _LANES
    o2 = o[:n_main].reshape(rows, _LANES)
    b2 = b[:n_main].reshape(rows, _LANES)

    # Row tile sized in bytes (~4 MiB per input per grid step), rounded to a
    # whole number of in-kernel chunks, never larger than the data.
    itemsize = max(o2.dtype.itemsize, b2.dtype.itemsize)
    target_rows = max(
        _CHUNK_ROWS,
        (_TARGET_BLOCK_BYTES // (_LANES * itemsize)) // _CHUNK_ROWS * _CHUNK_ROWS,
    )
    tile_rows = rows if rows <= target_rows else target_rows

    num_cores = _num_tensorcores()
    num_row_blocks = pl.cdiv(rows, tile_rows)
    blocks_per_core = pl.cdiv(num_row_blocks, num_cores)
    # True iff some block is ragged (partial last block) or some grid step
    # maps to a clamped duplicate block (odd block count split over 2 cores).
    any_ragged = (blocks_per_core * num_cores * tile_rows) != rows

    if blocks_per_core * num_cores > num_row_blocks:
        def in_index_map(c, i):
            # Out-of-range logical blocks re-read the last real block; their
            # contribution is masked to zero inside the kernel.
            return (jnp.minimum(c * blocks_per_core + i, num_row_blocks - 1), 0)
    else:
        def in_index_map(c, i):
            return (c * blocks_per_core + i, 0)

    kernel = functools.partial(
        _surface_loss_kernel,
        tile_rows=tile_rows,
        blocks_per_core=blocks_per_core,
        rows_valid=rows,
        any_ragged=any_ragged,
    )

    partials = pl.pallas_call(
        kernel,
        out_shape=jax.ShapeDtypeStruct((num_cores, 1), jnp.float32),
        grid_spec=pltpu.PrefetchScalarGridSpec(
            num_scalar_prefetch=0,
            grid=(num_cores, blocks_per_core),
            in_specs=[
                pl.BlockSpec((tile_rows, _LANES), in_index_map),
                pl.BlockSpec((tile_rows, _LANES), in_index_map),
            ],
            out_specs=pl.BlockSpec(
                (1, 1), lambda c, i: (c, 0), memory_space=pltpu.SMEM
            ),
            scratch_shapes=[pltpu.VMEM((_SUBLANES, _LANES), jnp.float32)],
        ),
        compiler_params=pltpu.CompilerParams(
            dimension_semantics=("parallel", "arbitrary"),
            vmem_limit_bytes=_VMEM_LIMIT_BYTES,
        ),
    )(o2, b2)

    return (jnp.sum(partials) + tail) / jnp.float32(n)


if __name__ == "__main__":
    key = jax.random.PRNGKey(0)
    k1, k2, k3 = jax.random.split(key, 3)

    # NCHW, same convention as the PyTorch module.
    B, C, H, W = 2, 4, 16, 16
    output = jax.random.normal(k1, (B, C, H, W), dtype=jnp.float32)
    bounds = jax.random.uniform(k2, (B, C, H, W), dtype=jnp.float32)
    target = (jax.random.uniform(k3, (B, C, H, W)) > 0.5).astype(jnp.float32)

    loss = surface_loss(output, bounds, target)
    loss = jax.block_until_ready(loss)

    ref = jnp.mean(output.reshape(-1) * bounds.reshape(-1))
    assert jnp.allclose(loss, ref, rtol=1e-5, atol=1e-5), (loss, ref)

    # Extra check: a lane-unaligned size exercises the full-extent block, the
    # non-multiple-of-8 accumulate path and the wrapper-side tail sum.
    o_odd = jax.random.normal(k1, (3, 5, 7, 11), dtype=jnp.float32)
    b_odd = jax.random.uniform(k2, (3, 5, 7, 11), dtype=jnp.float32)
    loss_odd = jax.block_until_ready(surface_loss(o_odd, b_odd, None))
    ref_odd = jnp.mean(o_odd.reshape(-1) * b_odd.reshape(-1))
    assert jnp.allclose(loss_odd, ref_odd, rtol=1e-5, atol=1e-5), (loss_odd, ref_odd)

    print("KERNEL_OK")
</pallas_src>

<mosaic_0001>
module attributes {stable_mosaic.version = 11 : i64} {
  func.func @_surface_loss_kernel(%arg0: i32, %arg1: i32, %arg2: memref<16x128xf32, #tpu.memory_space<vmem>>, %arg3: memref<16x128xf32, #tpu.memory_space<vmem>>, %arg4: memref<1x1xf32, #tpu.memory_space<smem>>, %arg5: memref<8x128xf32, #tpu.memory_space<vmem>>) attributes {dimension_semantics = [#tpu.dimension_semantics<parallel>, #tpu.dimension_semantics<arbitrary>], iteration_bounds = array<i64: 1, 1>, scalar_prefetch = 0 : i64, scratch_operands = 1 : i64, tpu.core_type = #tpu.core_type<tc>, window_params = [{transform_indices = @transform_0, window_bounds = array<i64: 16, 128>}, {transform_indices = @transform_1, window_bounds = array<i64: 16, 128>}, {transform_indices = @transform_2, window_bounds = array<i64: 1, 1>}]} {
    %c0_i32 = arith.constant 0 : i32
    %0 = arith.cmpi eq, %arg1, %c0_i32 : i32
    %1 = arith.extui %0 : i1 to i32
    %c0_i32_0 = arith.constant 0 : i32
    %2 = arith.cmpi ne, %1, %c0_i32_0 : i32
    scf.if %2 {
      %cst_10 = arith.constant 0.000000e+00 : f32
      %14 = vector.broadcast %cst_10 : f32 to vector<8x128xf32>
      %c0_11 = arith.constant 0 : index
      %c0_12 = arith.constant 0 : index
      %15 = vector.load %arg5[%c0_11, %c0_12] : memref<8x128xf32, #tpu.memory_space<vmem>>, vector<8x128xf32>
      tpu.vector_store %arg5[%c0_11, %c0_12], %14 {strides = array<i32>} : memref<8x128xf32, #tpu.memory_space<vmem>>, vector<8x128xf32>,
    } else {
    }
    %c0 = arith.constant 0 : index
    %c0_1 = arith.constant 0 : index
    %3 = vector.load %arg2[%c0, %c0_1] : memref<16x128xf32, #tpu.memory_space<vmem>>, vector<16x128xf32>
    %c0_2 = arith.constant 0 : index
    %c0_3 = arith.constant 0 : index
    %4 = vector.load %arg3[%c0_2, %c0_3] : memref<16x128xf32, #tpu.memory_space<vmem>>, vector<16x128xf32>
    %5 = arith.mulf %3, %4 : vector<16x128xf32>
    %c0_4 = arith.constant 0 : index
    %c0_5 = arith.constant 0 : index
    %6 = vector.load %arg5[%c0_4, %c0_5] : memref<8x128xf32, #tpu.memory_space<vmem>>, vector<8x128xf32>
    %7 = vector.shape_cast %5 : vector<16x128xf32> to vector<2x8x128xf32>
    %cst = arith.constant dense<0.000000e+00> : vector<8x128xf32>
    %8 = vector.multi_reduction <add>, %7, %cst [0] : vector<2x8x128xf32> to vector<8x128xf32>
    %9 = arith.addf %6, %8 : vector<8x128xf32>
    %c0_6 = arith.constant 0 : index
    %c0_7 = arith.constant 0 : index
    %10 = vector.load %arg5[%c0_6, %c0_7] : memref<8x128xf32, #tpu.memory_space<vmem>>, vector<8x128xf32>
    tpu.vector_store %arg5[%c0_6, %c0_7], %9 {strides = array<i32>} : memref<8x128xf32, #tpu.memory_space<vmem>>, vector<8x128xf32>,
    %c0_i32_8 = arith.constant 0 : i32
    %11 = arith.cmpi eq, %arg1, %c0_i32_8 : i32
    %12 = arith.extui %11 : i1 to i32
    %c0_i32_9 = arith.constant 0 : i32
    %13 = arith.cmpi ne, %12, %c0_i32_9 : i32
    scf.if %13 {
      %c0_10 = arith.constant 0 : index
      %c0_11 = arith.constant 0 : index
      %14 = vector.load %arg5[%c0_10, %c0_11] : memref<8x128xf32, #tpu.memory_space<vmem>>, vector<8x128xf32>
      %15 = vector.shape_cast %14 : vector<8x128xf32> to vector<1x8x128xf32>
      %cst_12 = arith.constant dense<0.000000e+00> : vector<1xf32>
      %16 = vector.multi_reduction <add>, %15, %cst_12 [1, 2] : vector<1x8x128xf32> to vector<1xf32>
      %17 = vector.shape_cast %16 : vector<1xf32> to vector<1x1x1xf32>
      %18 = vector.extract %17[0, 0, 0] : f32 from vector<1x1x1xf32>
      %c0_13 = arith.constant 0 : index
      %c0_14 = arith.constant 0 : index
      %19 = memref.load %arg4[%c0_13, %c0_14] : memref<1x1xf32, #tpu.memory_space<smem>>
      memref.store %18, %arg4[%c0_13, %c0_14] : memref<1x1xf32, #tpu.memory_space<smem>>
    } else {
    }
    return
  }
  func.func @transform_0(%arg0: i32, %arg1: i32) -> (i32, i32) {
    %c1_i32 = arith.constant 1 : i32
    %0 = arith.muli %arg0, %c1_i32 : i32
    %1 = arith.addi %0, %arg1 : i32
    %c0_i32 = arith.constant 0 : i32
    %c0_i32_0 = arith.constant 0 : i32
    return %1, %c0_i32 : i32, i32
  }
  func.func @transform_1(%arg0: i32, %arg1: i32) -> (i32, i32) {
    %c1_i32 = arith.constant 1 : i32
    %0 = arith.muli %arg0, %c1_i32 : i32
    %1 = arith.addi %0, %arg1 : i32
    %c0_i32 = arith.constant 0 : i32
    %c0_i32_0 = arith.constant 0 : i32
    return %1, %c0_i32 : i32, i32
  }
  func.func @transform_2(%arg0: i32, %arg1: i32) -> (i32, i32) {
    %c0_i32 = arith.constant 0 : i32
    %c0_i32_0 = arith.constant 0 : i32
    return %arg0, %c0_i32 : i32, i32
  }
}

</mosaic_0001>

<llo_original>
// kernel: tpu_custom_call.1
$region0: #{tpu_custom_call.1}
  #allocation0 [shape = 'u32[]', space=smem, size = 0x4, offset = 0x4, fixed_abs, tag = 'smem constant byte address 0x4 - core index']
  #allocation1 [shape = 'u32[72,128]{1,0:T(1,128)}', space=vmem, size = 0x9000, scoped, tag = 'internal scratch']
  #allocation2 [shape = 'f32[8,128]{1,0:T(8,128)}', space=vmem, size = 0x1000, scoped, tag = 'scratch operand']
  %s0 = inlined_call_operand.hbm [shape: f32[16,128], index: 0, kind: input, shape index: {}]
  %s1 = inlined_call_operand.hbm [shape: f32[16,128], index: 1, kind: input, shape index: {}]
  %s2 = inlined_call_operand.hbm [shape: f32[1,1], index: 2, kind: output, shape index: {}]
  %s3 = sld [smem:[#allocation0]]
  $region34: #{tpu_custom_call.1} parent=0
    _
  %s5 = ssub.s32 1, %s3
  %s6 = scalar_select 0, %s5, %s3
  $region1: #{tpu_custom_call.1} parent=0
    #allocation3 [shape = 'u8[8192]{0}', space=vmem, size = 0x2000, scoped, tag = 'input window, operand 0, single buffered']
    #allocation4 [shape = 's32[1]{0}', space=sflag, size = 0x4, scoped, tag = 'scoped memory for tpu_custom_call.1']
    #allocation5 [shape = 's32[1]{0}', space=sflag, size = 0x4, scoped, tag = 'scoped memory for tpu_custom_call.1']
    #allocation6 [shape = 'u8[8192]{0}', space=vmem, size = 0x2000, scoped, tag = 'input window, operand 1, single buffered']
    #allocation7 [shape = 's32[1]{0}', space=sflag, size = 0x4, scoped, tag = 'scoped memory for tpu_custom_call.1']
    #allocation8 [shape = 'u8[512]{0}', space=smem, size = 0x200, scoped, tag = 'output window, operand 0, single buffered']
    %7 = vsyncpa [#allocation4], 0
    %8 = vsyncpa [#allocation7], 0
    %9 = vsyncpa [#allocation5], 0
    // Predicated region
    $region2: #{tpu_custom_call.1} parent=1 // pred_check
      _
    $region3: #{tpu_custom_call.1} parent=1 // pred_check_branch
      %11 = sbr.rel (0) target = $region5
    $region4: #{tpu_custom_call.1} parent=1 // pred_region
      %s12 = sadd.s32 0, 0
      %s13 = smul.u32 2, %s12
      %15 = vsyncadd [#allocation4], 0
      %s16 = smul.addr %s13, 8
      %s17 = scalar_lea.hbm %s0, %s16
      %s18 = sshll.u32 %s17, 4
      %s19 = int_to_ptr.hbm [resolvable:$true] %s18
      %s20 = sshll.u32 [#allocation3], 4
      %s21 = int_to_ptr.vmem [resolvable:$true] %s20
      %26 = dma.hbm_to_vmem [thread:$0]  %s19, 256, %s21, [#allocation4], 128, 128, 8
    $region5: #{tpu_custom_call.1} parent=1 // pred_fallthru
      _
    // Predicated region
    $region6: #{tpu_custom_call.1} parent=1 // pred_check
      _
    $region7: #{tpu_custom_call.1} parent=1 // pred_check_branch
      %28 = sbr.rel (0) target = $region9
    $region8: #{tpu_custom_call.1} parent=1 // pred_region
      %s29 = sadd.s32 0, 0
      %s30 = smul.u32 2, %s29
      %32 = vsyncadd [#allocation7], 0
      %s33 = smul.addr %s30, 8
      %s34 = scalar_lea.hbm %s1, %s33
      %s35 = sshll.u32 %s34, 4
      %s36 = int_to_ptr.hbm [resolvable:$true] %s35
      %s37 = sshll.u32 [#allocation6], 4
      %s38 = int_to_ptr.vmem [resolvable:$true] %s37
      %43 = dma.hbm_to_vmem [thread:$0]  %s36, 256, %s38, [#allocation7], 128, 128, 8
    $region9: #{tpu_custom_call.1} parent=1 // pred_fallthru
      _
    // Predicated region
    $region10: #{tpu_custom_call.1} parent=1 // pred_check
      _
    $region11: #{tpu_custom_call.1} parent=1 // pred_check_branch
      %45 = sbr.rel (0) target = $region13
    $region12: #{tpu_custom_call.1} parent=1 // pred_region
      %47 = dma.done [#allocation4], 256
    $region13: #{tpu_custom_call.1} parent=1 // pred_fallthru
      _
    // Predicated region
    $region14: #{tpu_custom_call.1} parent=1 // pred_check
      _
    $region15: #{tpu_custom_call.1} parent=1 // pred_check_branch
      %49 = sbr.rel (0) target = $region17
    $region16: #{tpu_custom_call.1} parent=1 // pred_region
      %51 = dma.done [#allocation7], 256
    $region17: #{tpu_custom_call.1} parent=1 // pred_fallthru
      _
    %s52 = sadd.s32 0, 0
    %s53 = smul.u32 2, %s52
    %s54 = sadd.s32 0, 0
    %s55 = smul.u32 2, %s54
    %p56 = scmp.eq.s32.totalorder 0, 0
    // Predicated region
    $region18: #{tpu_custom_call.1} parent=1 // pred_check
      %p57 = pneg %p56
    $region19: #{tpu_custom_call.1} parent=1 // pred_check_branch
      %59 = sbr.rel (%p57) target = $region21
    $region20: #{tpu_custom_call.1} parent=1 // pred_region
      %60 = vst [vmem:[#allocation2] sm:$0xff] 0.0
    $region21: #{tpu_custom_call.1} parent=1 // pred_fallthru
      _
    %v61 = vld [vmem:[#allocation3] sm:$0xff]
    %v62 = vld [vmem:[#allocation3 + $0x8] sm:$0xff]
    %v63 = vld [vmem:[#allocation6] sm:$0xff]
    %v64 = vld [vmem:[#allocation6 + $0x8] sm:$0xff]
    %v65 = vmul.f32 %v61, %v63
    %v66 = vmul.f32 %v62, %v64
    %v67 = vld [vmem:[#allocation2] sm:$0xff]
    %v68 = vadd.f32 %v65, %v66
    %v69 = vadd.f32 %v67, %v68
    %70 = vst [vmem:[#allocation2] sm:$0xff] %v69
    // Predicated region
    $region22: #{tpu_custom_call.1} parent=1 // pred_check
      %p71 = pneg %p56
    $region23: #{tpu_custom_call.1} parent=1 // pred_check_branch
      %73 = sbr.rel (%p71) target = $region25
    $region24: #{tpu_custom_call.1} parent=1 // pred_region
      %v74 = vld [vmem:[#allocation2] sm:$0xff]
      %75 = vadd.xlane.f32.xlu0 %v74
      %v76 = vpop.xlane.xlu0 %75
      %v77 = vrot.slane %v76, 4
      %v78 = vadd.f32 %v76, %v77
      %v79 = vrot.slane %v78, 2
      %v80 = vadd.f32 %v78, %v79
      %v81 = vrot.slane %v80, 1
      %v82 = vadd.f32 %v80, %v81
      %s83 = vtos %v82
      %s84 = scalar_lea.smem [#allocation8], 0
      %85 = sst [smem:[%s84]] %s83
    $region25: #{tpu_custom_call.1} parent=1 // pred_fallthru
      _
    // Predicated region
    $region26: #{tpu_custom_call.1} parent=1 // pred_check
      _
    $region27: #{tpu_custom_call.1} parent=1 // pred_check_branch
      %87 = sbr.rel (0) target = $region29
    $region28: #{tpu_custom_call.1} parent=1 // pred_region
      %89 = vsyncadd [#allocation5], 0
      %s91 = sshll.u32 %s2, 4
      %s92 = int_to_ptr.hbm [resolvable:$true] %s91
      %94 = dma.smem_to_hbm [#allocation8], 16, %s92, [#allocation5]
    $region29: #{tpu_custom_call.1} parent=1 // pred_fallthru
      _
    // Predicated region
    $region30: #{tpu_custom_call.1} parent=1 // pred_check
      _
    $region31: #{tpu_custom_call.1} parent=1 // pred_check_branch
      %96 = sbr.rel (0) target = $region33
    $region32: #{tpu_custom_call.1} parent=1 // pred_region
      %98 = dma.done [#allocation5], 16
    $region33: #{tpu_custom_call.1} parent=1 // pred_fallthru
      _
    %99 = sfence
    %100 = vsyncpa [#allocation4], 1
    %101 = vsyncpa [#allocation7], 1
    %102 = vsyncpa [#allocation5], 1

</llo_original>
